<compile_context>
chip_gen: v7x
topology: tpu7x:2x2x1
jax: 0.10.0
libtpu: 0.0.40
codegen_flags: <defaults>
</compile_context>

<pallas_src>
import jax
import jax.numpy as jnp
import numpy as np
from jax.experimental import pallas as pl
from jax.experimental.pallas import tpu as pltpu

H_IN = 3
W_IN = 3
K = 3
H_OUT = H_IN + K - 1  # 5
W_OUT = W_IN + K - 1  # 5
POOL_N = H_OUT * 3    # 15 elements per adaptive-avg-pool window


def _convt_pool_kernel(p_ref, o_ref):
    """All-scalar fused forward.

    p_ref : f32[16] in SMEM, laid out as
            [e0_0, e0_1, e0_2, e1_0, e1_1, e1_2, bias,
             x00, x01, x02, x10, x11, x12, x20, x21, x22]
            where e*_q already include the 1/15 pooling factor.
    o_ref : f32[2] in SMEM -- the two pooled outputs.
    """
    # Column sums of the input (every row is fully covered by the row window).
    xc0 = p_ref[7] + p_ref[10] + p_ref[13]
    xc1 = p_ref[8] + p_ref[11] + p_ref[14]
    xc2 = p_ref[9] + p_ref[12] + p_ref[15]

    b = p_ref[6]
    o_ref[0] = b + p_ref[0] * xc0 + p_ref[1] * xc1 + p_ref[2] * xc2
    o_ref[1] = b + p_ref[3] * xc0 + p_ref[4] * xc1 + p_ref[5] * xc2


@jax.jit
def model_forward(x_nchw, weight, bias):
    """x_nchw: (1,1,3,3) f32; weight: (1,1,3,3) f32; bias: (1,) -> (1,1,1,2)."""
    # The kernel hard-codes H_IN = W_IN = K = 3; fail loudly otherwise.
    assert x_nchw.shape == (1, 1, H_IN, W_IN), x_nchw.shape
    assert weight.shape == (1, 1, K, K), weight.shape
    assert bias.shape == (1,), bias.shape

    x2d = x_nchw[0, 0].astype(jnp.float32)    # (3, 3)
    w2d = weight[0, 0].astype(jnp.float32)    # (3, 3)
    b1 = bias.astype(jnp.float32)             # (1,)

    # Weight-only reductions, hoisted out of the kernel (constant-folded /
    # fused by XLA under jit).
    c = jnp.sum(w2d, axis=0)                  # column sums [c0, c1, c2]
    inv_n = jnp.float32(1.0 / POOL_N)
    # window 0: output cols 0..2  -> kj <= 2 - q ; window 1: cols 2..4 -> kj >= 2 - q
    e0 = jnp.stack([c[0] + c[1] + c[2], c[0] + c[1], c[0]]) * inv_n
    e1 = jnp.stack([c[2], c[1] + c[2], c[0] + c[1] + c[2]]) * inv_n

    packed = jnp.concatenate([e0, e1, b1, x2d.reshape(-1)])   # f32[16]

    out = pl.pallas_call(
        _convt_pool_kernel,
        out_shape=jax.ShapeDtypeStruct((2,), jnp.float32),
        in_specs=[pl.BlockSpec(memory_space=pltpu.MemorySpace.SMEM)],
        out_specs=pl.BlockSpec(memory_space=pltpu.MemorySpace.SMEM),
        cost_estimate=pl.CostEstimate(flops=36, bytes_accessed=72,
                                      transcendentals=0),
    )(packed)

    return out.reshape(1, 1, 1, 2)


def _reference(x_nchw, weight, bias):
    """Pure-numpy reference of the PyTorch forward (silent sanity check)."""
    x = np.asarray(x_nchw, np.float64)[0, 0]
    w = np.asarray(weight, np.float64)[0, 0]
    b = float(np.asarray(bias, np.float64)[0])
    y = np.full((H_OUT, W_OUT), b, np.float64)
    for i in range(H_OUT):
        for j in range(W_OUT):
            for ki in range(K):
                for kj in range(K):
                    pi, pj = i - ki, j - kj
                    if 0 <= pi < H_IN and 0 <= pj < W_IN:
                        y[i, j] += w[ki, kj] * x[pi, pj]
    # MaxPool1d(1) is identity; adaptive_avg_pool2d((1,2)) on (5,5):
    out0 = y[:, 0:3].mean()
    out1 = y[:, 2:5].mean()
    return np.array([[[[out0, out1]]]], np.float64)


if __name__ == "__main__":
    key = jax.random.PRNGKey(0)
    kx, kw, kb = jax.random.split(key, 3)

    # ConvTranspose2d(1, 1, 3) default init: uniform(-sqrt(k), sqrt(k)), k = 1/9.
    bound = 1.0 / 3.0
    weight = jax.random.uniform(kw, (1, 1, 3, 3), jnp.float32, -bound, bound)
    bias = jax.random.uniform(kb, (1,), jnp.float32, -bound, bound)

    x1 = jax.random.normal(kx, (1, 1, 3, 3), jnp.float32)

    out = model_forward(x1, weight, bias)
    out = jax.block_until_ready(out)

    ref = _reference(np.array(x1), np.array(weight), np.array(bias))
    assert out.shape == (1, 1, 1, 2), out.shape
    np.testing.assert_allclose(np.array(out, np.float64), ref, rtol=1e-5, atol=1e-5)

    print("KERNEL_OK")
</pallas_src>

<mosaic_0001>
module attributes {stable_mosaic.version = 11 : i64} {
  func.func @_convt_pool_kernel(%arg0: memref<16xf32, #tpu.memory_space<smem>>, %arg1: memref<2xf32, #tpu.memory_space<smem>>) attributes {dimension_semantics = [], scalar_prefetch = 0 : i64, scratch_operands = 0 : i64, tpu.core_type = #tpu.core_type<tc>} {
    %c7 = arith.constant 7 : index
    %0 = memref.load %arg0[%c7] : memref<16xf32, #tpu.memory_space<smem>>
    %c10 = arith.constant 10 : index
    %1 = memref.load %arg0[%c10] : memref<16xf32, #tpu.memory_space<smem>>
    %2 = arith.addf %0, %1 : f32
    %c13 = arith.constant 13 : index
    %3 = memref.load %arg0[%c13] : memref<16xf32, #tpu.memory_space<smem>>
    %4 = arith.addf %2, %3 : f32
    %c8 = arith.constant 8 : index
    %5 = memref.load %arg0[%c8] : memref<16xf32, #tpu.memory_space<smem>>
    %c11 = arith.constant 11 : index
    %6 = memref.load %arg0[%c11] : memref<16xf32, #tpu.memory_space<smem>>
    %7 = arith.addf %5, %6 : f32
    %c14 = arith.constant 14 : index
    %8 = memref.load %arg0[%c14] : memref<16xf32, #tpu.memory_space<smem>>
    %9 = arith.addf %7, %8 : f32
    %c9 = arith.constant 9 : index
    %10 = memref.load %arg0[%c9] : memref<16xf32, #tpu.memory_space<smem>>
    %c12 = arith.constant 12 : index
    %11 = memref.load %arg0[%c12] : memref<16xf32, #tpu.memory_space<smem>>
    %12 = arith.addf %10, %11 : f32
    %c15 = arith.constant 15 : index
    %13 = memref.load %arg0[%c15] : memref<16xf32, #tpu.memory_space<smem>>
    %14 = arith.addf %12, %13 : f32
    %c6 = arith.constant 6 : index
    %15 = memref.load %arg0[%c6] : memref<16xf32, #tpu.memory_space<smem>>
    %c0 = arith.constant 0 : index
    %16 = memref.load %arg0[%c0] : memref<16xf32, #tpu.memory_space<smem>>
    %17 = arith.mulf %16, %4 : f32
    %18 = arith.addf %15, %17 : f32
    %c1 = arith.constant 1 : index
    %19 = memref.load %arg0[%c1] : memref<16xf32, #tpu.memory_space<smem>>
    %20 = arith.mulf %19, %9 : f32
    %21 = arith.addf %18, %20 : f32
    %c2 = arith.constant 2 : index
    %22 = memref.load %arg0[%c2] : memref<16xf32, #tpu.memory_space<smem>>
    %23 = arith.mulf %22, %14 : f32
    %24 = arith.addf %21, %23 : f32
    %c0_0 = arith.constant 0 : index
    %25 = memref.load %arg1[%c0_0] : memref<2xf32, #tpu.memory_space<smem>>
    memref.store %24, %arg1[%c0_0] : memref<2xf32, #tpu.memory_space<smem>>
    %c3 = arith.constant 3 : index
    %26 = memref.load %arg0[%c3] : memref<16xf32, #tpu.memory_space<smem>>
    %27 = arith.mulf %26, %4 : f32
    %28 = arith.addf %15, %27 : f32
    %c4 = arith.constant 4 : index
    %29 = memref.load %arg0[%c4] : memref<16xf32, #tpu.memory_space<smem>>
    %30 = arith.mulf %29, %9 : f32
    %31 = arith.addf %28, %30 : f32
    %c5 = arith.constant 5 : index
    %32 = memref.load %arg0[%c5] : memref<16xf32, #tpu.memory_space<smem>>
    %33 = arith.mulf %32, %14 : f32
    %34 = arith.addf %31, %33 : f32
    %c1_1 = arith.constant 1 : index
    %35 = memref.load %arg1[%c1_1] : memref<2xf32, #tpu.memory_space<smem>>
    memref.store %34, %arg1[%c1_1] : memref<2xf32, #tpu.memory_space<smem>>
    return
  }
}

</mosaic_0001>

<llo_original>
// kernel: squeeze.23
$region0: #{squeeze.23}
  %s0 = inlined_call_operand.vmem [shape: f32[3,3], index: 0, kind: input, shape index: {}]
  %s1 = inlined_call_operand.vmem [shape: f32[9], index: 1, kind: output, shape index: {}]
  $region1: #{squeeze.23} parent=0
    #allocation0 [shape = 'u8[4096]{0}', space=vmem, size = 0x1000, scoped, tag = 'scoped mem for output reshape']
    #allocation1 [shape = 'u8[4096]{0}', space=vmem, size = 0x1000, scoped, tag = 'scoped mem for input reshape']
    %s3 = sshllo.u32 0, 4
    %v4 = vld [vmem:[%s0] sm:%s3]
    %5 = vst [vmem:[#allocation1] sm:%s3] %v4
    %v6 = vld [vmem:[#allocation1] sm:$0x1]
    %vm7 = vcmask 23552
    %8 = vst.msk [vmem:[#allocation0] sm:$0x1] %vm7, %v6
    %s9 = scalar_lea.vmem [#allocation1], 2
    %v10 = vld [vmem:[%s9] sm:$0x1]
    %11 = vrot.lane.b32.xlu0 %v10, 6
    %v12 = vpop.permute.xlu0 %11
    %vm13 = vcmask 72752
    %14 = vst.msk [vmem:[#allocation0] sm:$0x1] %vm13, %v12
    %s15 = scalar_lea.vmem [#allocation1], 1
    %v16 = vld [vmem:[%s15] sm:$0x1]
    %17 = vrot.lane.b32.xlu0 %v16, 3
    %v18 = vpop.permute.xlu0 %17
    %vm19 = vcmask 48152
    %20 = vst.msk [vmem:[#allocation0] sm:$0x1] %vm19, %v18
    %s22 = sshllo.u32 0, 1
    %v24 = vld [vmem:[#allocation0] sm:%s22]
    %s25 = sshllo.u32 0, 1
    %26 = vst [vmem:[%s1] sm:%s25] %v24

// kernel: model_forward.1
$region0: #{model_forward.1}
  #allocation0 [shape = 'u32[]', space=smem, size = 0x4, offset = 0x4, fixed_abs, tag = 'smem constant byte address 0x4 - core index']
  #allocation1 [shape = 'u32[144,128]{1,0:T(1,128)}', space=vmem, size = 0x12000, scoped, tag = 'internal scratch']
  %s0 = inlined_call_operand.vmem [shape: f32[16], index: 0, kind: input, shape index: {}]
  %s1 = inlined_call_operand.hbm [shape: f32[2], index: 1, kind: output, shape index: {}]
  %s2 = sld [smem:[#allocation0]]
  $region18: #{model_forward.1} parent=0
    _
  %s4 = ssub.s32 1, %s2
  %s5 = scalar_select 0, %s4, %s2
  $region1: #{model_forward.1} parent=0
    #allocation2 [shape = 'u8[512]{0}', space=smem, size = 0x200, scoped, tag = 'input window, operand 0, single buffered']
    #allocation3 [shape = 's32[1]{0}', space=sflag, size = 0x4, scoped, tag = 'scoped memory for model_forward.1']
    #allocation4 [shape = 's32[1]{0}', space=sflag, size = 0x4, scoped, tag = 'scoped memory for model_forward.1']
    #allocation5 [shape = 'u8[512]{0}', space=smem, size = 0x200, scoped, tag = 'output window, operand 0, single buffered']
    %6 = vsyncpa [#allocation4], 0
    %7 = vsyncpa [#allocation3], 0
    // Predicated region
    $region2: #{model_forward.1} parent=1 // pred_check
      _
    $region3: #{model_forward.1} parent=1 // pred_check_branch
      %9 = sbr.rel (0) target = $region5
    $region4: #{model_forward.1} parent=1 // pred_region
      %s11 = ssub.s32 16, 16
      %12 = vsyncadd [#allocation4], %s11
      %s14 = sshll.u32 %s0, 4
      %s15 = int_to_ptr.vmem [resolvable:$true] %s14
      %17 = dma.vmem_to_smem %s15, 16, [#allocation2], [#allocation4]
    $region5: #{model_forward.1} parent=1 // pred_fallthru
      _
    // Predicated region
    $region6: #{model_forward.1} parent=1 // pred_check
      _
    $region7: #{model_forward.1} parent=1 // pred_check_branch
      %19 = sbr.rel (0) target = $region9
    $region8: #{model_forward.1} parent=1 // pred_region
      %20 = dma.done [#allocation4], 16
    $region9: #{model_forward.1} parent=1 // pred_fallthru
      _
    %21 = sfence
    %s22 = sld [smem:[#allocation2 + $0x7]]
    %s23 = sld [smem:[#allocation2 + $0xa]]
    %s24 = sadd.f32 %s22, %s23
    %s25 = sld [smem:[#allocation2 + $0xd]]
    %s26 = sadd.f32 %s24, %s25
    %s27 = sld [smem:[#allocation2 + $0x8]]
    %s28 = sld [smem:[#allocation2 + $0xb]]
    %s29 = sadd.f32 %s27, %s28
    %s30 = sld [smem:[#allocation2 + $0xe]]
    %s31 = sadd.f32 %s29, %s30
    %s32 = sld [smem:[#allocation2 + $0x9]]
    %s33 = sld [smem:[#allocation2 + $0xc]]
    %s34 = sadd.f32 %s32, %s33
    %s35 = sld [smem:[#allocation2 + $0xf]]
    %s36 = sadd.f32 %s34, %s35
    %s37 = sld [smem:[#allocation2 + $0x6]]
    %s38 = sld [smem:[#allocation2]]
    %s39 = smul.f32 %s38, %s26
    %s40 = sadd.f32 %s37, %s39
    %s41 = sld [smem:[#allocation2 + $0x1]]
    %s42 = smul.f32 %s41, %s31
    %s43 = sadd.f32 %s40, %s42
    %s44 = sld [smem:[#allocation2 + $0x2]]
    %s45 = smul.f32 %s44, %s36
    %s46 = sadd.f32 %s43, %s45
    %s47 = scalar_lea.smem [#allocation5], 0
    %48 = sst [smem:[%s47]] %s46
    %s49 = sld [smem:[#allocation2 + $0x3]]
    %s50 = smul.f32 %s49, %s26
    %s51 = sadd.f32 %s37, %s50
    %s52 = sld [smem:[#allocation2 + $0x4]]
    %s53 = smul.f32 %s52, %s31
    %s54 = sadd.f32 %s51, %s53
    %s55 = sld [smem:[#allocation2 + $0x5]]
    %s56 = smul.f32 %s55, %s36
    %s57 = sadd.f32 %s54, %s56
    %s58 = scalar_lea.smem [#allocation5], 1
    %59 = sst [smem:[%s58]] %s57
    // Predicated region
    $region10: #{model_forward.1} parent=1 // pred_check
      _
    $region11: #{model_forward.1} parent=1 // pred_check_branch
      %61 = sbr.rel (0) target = $region13
    $region12: #{model_forward.1} parent=1 // pred_region
      %s63 = ssub.s32 16, 16
      %64 = vsyncadd [#allocation3], %s63
      %67 = dma.smem_to_hbm [#allocation5], 16, %s1, [#allocation3]
    $region13: #{model_forward.1} parent=1 // pred_fallthru
      _
    // Predicated region
    $region14: #{model_forward.1} parent=1 // pred_check
      _
    $region15: #{model_forward.1} parent=1 // pred_check_branch
      %69 = sbr.rel (0) target = $region17
    $region16: #{model_forward.1} parent=1 // pred_region
      %70 = dma.done [#allocation3], 16
    $region17: #{model_forward.1} parent=1 // pred_fallthru
      _
    %71 = sfence
    %72 = vsyncpa [#allocation3], 1
    %73 = vsyncpa [#allocation4], 1

</llo_original>
